<compile_context>
chip_gen: v5e
topology: v5e:2x2
jax: 0.10.0
libtpu: 0.0.40
codegen_flags: <defaults>
</compile_context>

<pallas_src>
import functools

import jax
import jax.numpy as jnp
from jax.experimental import pallas as pl
from jax.experimental.pallas import tpu as pltpu

_LANE = 128
_VMEM_LIMIT = 64 * 1024 * 1024    # explicit scoped-VMEM limit (v5e default is only 16 MiB)
_TILE_BUDGET = 24 * 1024 * 1024   # conservative per-step budget (fits v7x's 64 MiB VMEM)


def _round_up(x, m):
    return (x + m - 1) // m * m


def _pick_row_tile(n, hp, budget=_TILE_BUDGET):
    """Largest row tile whose score block + resident p2s slab fit the VMEM budget."""
    cap = _round_up(n, 8)
    for tm in (512, 256, 128, 64, 32, 16, 8):
        if tm > cap:
            continue
        n_pad = _round_up(n, tm)
        need = (2 * tm * n_pad * 4      # scores block (f32) + exp temp headroom
                + n_pad * hp * 2        # resident p2s (bf16)
                + 6 * tm * hp * 4)      # double-buffered row tiles / projection temps
        if need <= budget:
            return tm, n_pad
    return 8, _round_up(n, 8)


# --------------------------- Kernel A: projections ---------------------------------
def _proj_kernel(z_ref, w_ref, b_ref, p1_ref, p2_ref, *, inv_tau, kp, hp):
    f32, bf16 = jnp.float32, jnp.bfloat16
    # First layer (block-diag packed): [tm, Kp] @ [Kp, 2Hp] -> bias -> ELU.
    h = jnp.dot(z_ref[...], w_ref[0:kp, :], preferred_element_type=f32) + b_ref[0:1, :]
    h = jnp.where(h > 0, h, jnp.exp(jnp.minimum(h, 0.0)) - 1.0)       # ELU(alpha=1)
    # Second layer (block-diag packed): [tm, 2Hp] @ [2Hp, 2Hp] -> bias.
    p = jnp.dot(h.astype(bf16), w_ref[kp:kp + 2 * hp, :],
                preferred_element_type=f32) + b_ref[1:2, :]
    p1 = p[:, :hp]
    p2 = p[:, hp:]
    # Fold the row L2 normalisation (and 1/tau on the z1 side) into the rows here so
    # the score kernel never touches an N x N rescale or a [N,1]->[1,N] transpose.
    inv1 = jax.lax.rsqrt(jnp.sum(p1 * p1, axis=-1, keepdims=True)) * inv_tau
    inv2 = jax.lax.rsqrt(jnp.sum(p2 * p2, axis=-1, keepdims=True))
    p1_ref[...] = (p1 * inv1).astype(bf16)
    p2_ref[...] = (p2 * inv2).astype(bf16)


# --------------------------- Kernel B: contrastive scores --------------------------
def _score_kernel(p1_ref, p2_ref, out_ref, *, n, tm):
    f32 = jnp.float32
    p1 = p1_ref[...]                      # [tm, Hp] bf16 (normalised, 1/tau folded)
    p2_all = p2_ref[...]                  # [N_pad, Hp] bf16 (normalised), resident
    # scores[r, j] = cos(p1_r, p2_j) / tau  -- one bf16 MXU matmul, f32 accumulation.
    scores = jax.lax.dot_general(p1, p2_all, (((1,), (1,)), ((), ())),
                                 preferred_element_type=f32)
    n_pad = p2_all.shape[0]
    if n_pad != n:  # trace-time branch: mask batch-padding columns out of the row sums
        col = jax.lax.broadcasted_iota(jnp.int32, scores.shape, 1)
        scores = jnp.where(col < n, scores, -1e30)
    # Max-subtracted logsumexp of each row; keeps the module's `+ 1e-8` exactly.
    m = jnp.max(scores, axis=1, keepdims=True)
    rs = jnp.sum(jnp.exp(scores - m), axis=1, keepdims=True)
    # Diagonal term as a row-wise dot against the matching rows (no eye mask).
    row0 = pl.multiple_of(pl.program_id(0) * tm, tm)
    p2_rows = p2_ref[pl.ds(row0, tm), :]
    diag = jnp.sum(p1.astype(f32) * p2_rows.astype(f32), axis=-1, keepdims=True)
    # per-row loss = log(sum_j exp(c_rj / tau) + 1e-8) - c_rr / tau
    out_ref[...] = m + jnp.log(rs + 1e-8 * jnp.exp(-m)) - diag


# --------------------------- Parameter packing --------------------------------------
def pack_params(params):
    """Packs the 8 weight/bias tensors into one block-diagonal bf16 weight slab and one
    f32 bias stack, zero-padding every feature dim to 128 lanes.

    Slab rows: [0, Kp) = blockdiag(W1a, W2a) ; [Kp, Kp + 2Hp) = blockdiag(W1b, W2b).
    All segment offsets are 128-row aligned (bf16 sublane tiles stay aligned).
    """
    (w1a, b1a, w1b, b1b, w2a, b2a, w2b, b2b) = params
    cf, h = w1a.shape
    kg = w2a.shape[0]
    hp = _round_up(h, _LANE)
    kp = _round_up(cf + kg, _LANE)

    w_first = jnp.zeros((kp, 2 * hp), jnp.float32)
    w_first = w_first.at[:cf, :h].set(w1a)
    w_first = w_first.at[cf:cf + kg, hp:hp + h].set(w2a)
    w_second = jnp.zeros((2 * hp, 2 * hp), jnp.float32)
    w_second = w_second.at[:h, :h].set(w1b)
    w_second = w_second.at[hp:hp + h, hp:hp + h].set(w2b)
    w_slab = jnp.concatenate([w_first, w_second], axis=0).astype(jnp.bfloat16)

    b_stack = jnp.zeros((2, 2 * hp), jnp.float32)
    b_stack = b_stack.at[0, :h].set(b1a[0])
    b_stack = b_stack.at[0, hp:hp + h].set(b2a[0])
    b_stack = b_stack.at[1, :h].set(b1b[0])
    b_stack = b_stack.at[1, hp:hp + h].set(b2b[0])
    return w_slab, b_stack, kp, hp


# --------------------------- Forward wrapper ----------------------------------------
def contrast_2view_forward(z1, z2, params, tau):
    """Contrast_2view forward (multi_loss=False path) on TPU via two Pallas kernels."""
    n, cf = z1.shape
    kg = z2.shape[1]
    w_slab, b_stack, kp, hp = pack_params(params)
    tm, n_pad = _pick_row_tile(n, hp)
    n_tiles = n_pad // tm

    # [z1 | z2] packed once, zero-padded to (n_pad, Kp), shipped as bf16 (it is the
    # MXU operand dtype anyway -> half the activation DMA bytes).
    z_cat = jnp.concatenate([z1, z2], axis=1).astype(jnp.bfloat16)
    z_cat = jnp.pad(z_cat, ((0, n_pad - n), (0, kp - (cf + kg))))

    cparams = pltpu.CompilerParams(dimension_semantics=("parallel",),
                                   vmem_limit_bytes=_VMEM_LIMIT)

    def resident(shape):  # full-array block, constant index -> DMA'd once, stays in VMEM
        return pl.BlockSpec(shape, lambda i: (0, 0))

    # --- Kernel A: block-diag MLP projections + folded normalisation ---------------
    p1s, p2s = pl.pallas_call(
        functools.partial(_proj_kernel, inv_tau=1.0 / float(tau), kp=kp, hp=hp),
        out_shape=(jax.ShapeDtypeStruct((n_pad, hp), jnp.bfloat16),
                   jax.ShapeDtypeStruct((n_pad, hp), jnp.bfloat16)),
        grid=(n_tiles,),
        in_specs=[pl.BlockSpec((tm, kp), lambda i: (i, 0)),
                  resident(w_slab.shape),
                  resident(b_stack.shape)],
        out_specs=(pl.BlockSpec((tm, hp), lambda i: (i, 0)),
                   pl.BlockSpec((tm, hp), lambda i: (i, 0))),
        compiler_params=cparams,
    )(z_cat, w_slab, b_stack)

    # --- Kernel B: per-row contrastive loss terms -----------------------------------
    per_row = pl.pallas_call(
        functools.partial(_score_kernel, n=n, tm=tm),
        out_shape=jax.ShapeDtypeStruct((n_pad, 1), jnp.float32),
        grid=(n_tiles,),
        in_specs=[pl.BlockSpec((tm, hp), lambda i: (i, 0)),
                  resident(p2s.shape)],
        out_specs=pl.BlockSpec((tm, 1), lambda i: (i, 0)),
        compiler_params=cparams,
    )(p1s, p2s)

    # Cheap trailing XLA reduction combines the per-row / per-core partials (keeps the
    # row-tile axis "parallel" so both v7x TensorCores contribute).
    return jnp.sum(per_row[:n, 0]) / n


# --------------------------- Init & references --------------------------------------
def _xavier_normal(key, in_dim, out_dim, gain=1.414):
    # PyTorch xavier_normal_ on a [out, in] weight; stored here as [in, out].
    std = gain * (2.0 / (in_dim + out_dim)) ** 0.5
    return std * jax.random.normal(key, (in_dim, out_dim), dtype=jnp.float32)


def init_params(key, cf_dim, kg_dim, hidden_dim):
    ks = jax.random.split(key, 8)
    w1a = _xavier_normal(ks[0], cf_dim, hidden_dim)
    w1b = _xavier_normal(ks[1], hidden_dim, hidden_dim)
    w2a = _xavier_normal(ks[2], kg_dim, hidden_dim)
    w2b = _xavier_normal(ks[3], hidden_dim, hidden_dim)
    b1a = 0.01 * jax.random.normal(ks[4], (1, hidden_dim), dtype=jnp.float32)
    b1b = 0.01 * jax.random.normal(ks[5], (1, hidden_dim), dtype=jnp.float32)
    b2a = 0.01 * jax.random.normal(ks[6], (1, hidden_dim), dtype=jnp.float32)
    b2b = 0.01 * jax.random.normal(ks[7], (1, hidden_dim), dtype=jnp.float32)
    return (w1a, b1a, w1b, b1b, w2a, b2a, w2b, b2b)


def _reference_f32(z1, z2, params, tau):
    """Module-faithful pure-f32 reference (mirrors the PyTorch forward exactly)."""
    (w1a, b1a, w1b, b1b, w2a, b2a, w2b, b2b) = params
    elu = lambda x: jnp.where(x > 0, x, jnp.exp(jnp.minimum(x, 0.0)) - 1.0)
    p1 = elu(z1 @ w1a + b1a) @ w1b + b1b
    p2 = elu(z2 @ w2a + b2a) @ w2b + b2b
    n1 = jnp.linalg.norm(p1, axis=-1, keepdims=True)
    n2 = jnp.linalg.norm(p2, axis=-1, keepdims=True)
    sim = jnp.exp((p1 @ p2.T) / (n1 @ n2.T) / tau)
    sim = sim / (jnp.sum(sim, axis=1, keepdims=True) + 1e-8)
    return -jnp.mean(jnp.log(jnp.sum(sim * jnp.eye(sim.shape[0]), axis=-1)))


def _reference_mixed(z1, z2, params, tau):
    """Mirrors the kernel's precision choices (bf16 MXU operands, folded norms/tau,
    max-subtracted logsumexp with the module's +1e-8)."""
    (w1a, b1a, w1b, b1b, w2a, b2a, w2b, b2b) = params
    bf16, f32 = jnp.bfloat16, jnp.float32
    dot = lambda a, b: jnp.dot(a.astype(bf16), b.astype(bf16), preferred_element_type=f32)
    elu = lambda x: jnp.where(x > 0, x, jnp.exp(jnp.minimum(x, 0.0)) - 1.0)
    p1 = dot(elu(dot(z1, w1a) + b1a), w1b) + b1b
    p2 = dot(elu(dot(z2, w2a) + b2a), w2b) + b2b
    inv1 = jax.lax.rsqrt(jnp.sum(p1 * p1, axis=-1, keepdims=True)) * (1.0 / float(tau))
    inv2 = jax.lax.rsqrt(jnp.sum(p2 * p2, axis=-1, keepdims=True))
    p1s = (p1 * inv1).astype(bf16)
    p2s = (p2 * inv2).astype(bf16)
    scores = jnp.dot(p1s, p2s.T, preferred_element_type=f32)
    diag = jnp.sum(p1s.astype(f32) * p2s.astype(f32), axis=-1, keepdims=True)
    m = jnp.max(scores, axis=1, keepdims=True)
    rs = jnp.sum(jnp.exp(scores - m), axis=1, keepdims=True)
    return jnp.mean(m + jnp.log(rs + 1e-8 * jnp.exp(-m)) - diag)


if __name__ == "__main__":
    # Small shapes implied by the module: z1 [cl_size, cf_dim], z2 [cl_size, kg_dim].
    cl_size, cf_dim, kg_dim, hidden_dim = 8, 16, 24, 32
    tau = 0.5

    key = jax.random.PRNGKey(0)
    k_z1, k_z2, k_p = jax.random.split(key, 3)
    z1 = jax.random.normal(k_z1, (cl_size, cf_dim), dtype=jnp.float32)
    z2 = jax.random.normal(k_z2, (cl_size, kg_dim), dtype=jnp.float32)
    params = init_params(k_p, cf_dim, kg_dim, hidden_dim)

    loss = contrast_2view_forward(z1, z2, params, tau)
    jax.block_until_ready(loss)

    # Tight check vs. a reference with the same bf16-MXU / folded-scaling precision.
    ref_mixed = _reference_mixed(z1, z2, params, tau)
    assert jnp.allclose(loss, ref_mixed, rtol=1e-3, atol=1e-3), (loss, ref_mixed)

    # Looser check vs. the module-faithful full-f32 math (bf16 MXU tolerance).
    ref_f32 = _reference_f32(z1, z2, params, tau)
    assert jnp.allclose(loss, ref_f32, rtol=5e-2, atol=5e-2), (loss, ref_f32)

    print("KERNEL_OK")
</pallas_src>

<mosaic_0001>
module attributes {stable_mosaic.version = 11 : i64} {
  func.func @_proj_kernel(%arg0: i32, %arg1: memref<8x128xbf16, #tpu.memory_space<vmem>>, %arg2: memref<384x256xbf16, #tpu.memory_space<vmem>>, %arg3: memref<2x256xf32, #tpu.memory_space<vmem>>, %arg4: memref<8x128xbf16, #tpu.memory_space<vmem>>, %arg5: memref<8x128xbf16, #tpu.memory_space<vmem>>) attributes {dimension_semantics = [#tpu.dimension_semantics<parallel>], iteration_bounds = array<i64: 1>, scalar_prefetch = 0 : i64, scratch_operands = 0 : i64, tpu.core_type = #tpu.core_type<tc>, window_params = [{transform_indices = @transform_0, window_bounds = array<i64: 8, 128>}, {pipeline_mode = #tpu.pipeline_mode<synchronous>, transform_indices = @transform_1, window_bounds = array<i64: 384, 256>}, {pipeline_mode = #tpu.pipeline_mode<synchronous>, transform_indices = @transform_2, window_bounds = array<i64: 2, 256>}, {transform_indices = @transform_3, window_bounds = array<i64: 8, 128>}, {transform_indices = @transform_4, window_bounds = array<i64: 8, 128>}]} {
    %c0 = arith.constant 0 : index
    %c0_0 = arith.constant 0 : index
    %0 = vector.load %arg1[%c0, %c0_0] : memref<8x128xbf16, #tpu.memory_space<vmem>>, vector<8x128xbf16>
    %c0_1 = arith.constant 0 : index
    %c0_2 = arith.constant 0 : index
    %1 = vector.load %arg2[%c0_1, %c0_2] : memref<384x256xbf16, #tpu.memory_space<vmem>>, vector<128x256xbf16>
    %cst = arith.constant dense<0.000000e+00> : vector<8x256xf32>
    %2 = tpu.matmul %0, %1, %cst {dimension_numbers = #tpu.dot_dimension_numbers<[1], [0], [0], [1], [0, 0, 1, 1], [], []>} : vector<8x128xbf16>, vector<128x256xbf16>, vector<8x256xf32> -> vector<8x256xf32>
    %c0_3 = arith.constant 0 : index
    %c0_4 = arith.constant 0 : index
    %3 = vector.load %arg3[%c0_3, %c0_4] : memref<2x256xf32, #tpu.memory_space<vmem>>, vector<1x256xf32>
    %4 = vector.broadcast %3 : vector<1x256xf32> to vector<8x256xf32>
    %5 = arith.addf %2, %4 : vector<8x256xf32>
    %cst_5 = arith.constant 0.000000e+00 : f32
    %6 = vector.broadcast %cst_5 : f32 to vector<8x256xf32>
    %7 = arith.cmpf ogt, %5, %6 : vector<8x256xf32>
    %cst_6 = arith.constant 0.000000e+00 : f32
    %8 = vector.broadcast %cst_6 : f32 to vector<8x256xf32>
    %9 = arith.minimumf %5, %8 : vector<8x256xf32>
    %10 = math.exp %9 : vector<8x256xf32>
    %cst_7 = arith.constant 1.000000e+00 : f32
    %11 = vector.broadcast %cst_7 : f32 to vector<8x256xf32>
    %12 = arith.subf %10, %11 : vector<8x256xf32>
    %13 = arith.select %7, %5, %12 : vector<8x256xi1>, vector<8x256xf32>
    %14 = arith.truncf %13 : vector<8x256xf32> to vector<8x256xbf16>
    %c128 = arith.constant 128 : index
    %c0_8 = arith.constant 0 : index
    %15 = vector.load %arg2[%c128, %c0_8] : memref<384x256xbf16, #tpu.memory_space<vmem>>, vector<256x256xbf16>
    %cst_9 = arith.constant dense<0.000000e+00> : vector<8x256xf32>
    %16 = tpu.matmul %14, %15, %cst_9 {dimension_numbers = #tpu.dot_dimension_numbers<[1], [0], [0], [1], [0, 0, 1, 1], [], []>} : vector<8x256xbf16>, vector<256x256xbf16>, vector<8x256xf32> -> vector<8x256xf32>
    %c1 = arith.constant 1 : index
    %c0_10 = arith.constant 0 : index
    %17 = vector.load %arg3[%c1, %c0_10] : memref<2x256xf32, #tpu.memory_space<vmem>>, vector<1x256xf32>
    %18 = vector.broadcast %17 : vector<1x256xf32> to vector<8x256xf32>
    %19 = arith.addf %16, %18 : vector<8x256xf32>
    %20 = vector.extract_strided_slice %19 {offsets = [0, 0], sizes = [8, 128], strides = [1, 1]} : vector<8x256xf32> to vector<8x128xf32>
    %21 = vector.extract_strided_slice %19 {offsets = [0, 128], sizes = [8, 128], strides = [1, 1]} : vector<8x256xf32> to vector<8x128xf32>
    %22 = arith.mulf %20, %20 : vector<8x128xf32>
    %cst_11 = arith.constant dense<0.000000e+00> : vector<8xf32>
    %23 = vector.multi_reduction <add>, %22, %cst_11 [1] : vector<8x128xf32> to vector<8xf32>
    %24 = vector.shape_cast %23 : vector<8xf32> to vector<8x1xf32>
    %25 = math.rsqrt %24 : vector<8x1xf32>
    %cst_12 = arith.constant 2.000000e+00 : f32
    %26 = vector.broadcast %cst_12 : f32 to vector<8x1xf32>
    %27 = arith.mulf %25, %26 : vector<8x1xf32>
    %28 = arith.mulf %21, %21 : vector<8x128xf32>
    %cst_13 = arith.constant dense<0.000000e+00> : vector<8xf32>
    %29 = vector.multi_reduction <add>, %28, %cst_13 [1] : vector<8x128xf32> to vector<8xf32>
    %30 = vector.shape_cast %29 : vector<8xf32> to vector<8x1xf32>
    %31 = math.rsqrt %30 : vector<8x1xf32>
    %32 = vector.broadcast %27 : vector<8x1xf32> to vector<8x128xf32>
    %33 = arith.mulf %20, %32 : vector<8x128xf32>
    %34 = arith.truncf %33 : vector<8x128xf32> to vector<8x128xbf16>
    %c0_14 = arith.constant 0 : index
    %c0_15 = arith.constant 0 : index
    %35 = vector.load %arg4[%c0_14, %c0_15] : memref<8x128xbf16, #tpu.memory_space<vmem>>, vector<8x128xbf16>
    tpu.vector_store %arg4[%c0_14, %c0_15], %34 {strides = array<i32>} : memref<8x128xbf16, #tpu.memory_space<vmem>>, vector<8x128xbf16>,
    %36 = vector.broadcast %31 : vector<8x1xf32> to vector<8x128xf32>
    %37 = arith.mulf %21, %36 : vector<8x128xf32>
    %38 = arith.truncf %37 : vector<8x128xf32> to vector<8x128xbf16>
    %c0_16 = arith.constant 0 : index
    %c0_17 = arith.constant 0 : index
    %39 = vector.load %arg5[%c0_16, %c0_17] : memref<8x128xbf16, #tpu.memory_space<vmem>>, vector<8x128xbf16>
    tpu.vector_store %arg5[%c0_16, %c0_17], %38 {strides = array<i32>} : memref<8x128xbf16, #tpu.memory_space<vmem>>, vector<8x128xbf16>,
    return
  }
  func.func @transform_0(%arg0: i32) -> (i32, i32) {
    %c0_i32 = arith.constant 0 : i32
    %c0_i32_0 = arith.constant 0 : i32
    return %arg0, %c0_i32 : i32, i32
  }
  func.func @transform_1(%arg0: i32) -> (i32, i32) {
    %c0_i32 = arith.constant 0 : i32
    %c0_i32_0 = arith.constant 0 : i32
    %c0_i32_1 = arith.constant 0 : i32
    return %c0_i32, %c0_i32_0 : i32, i32
  }
  func.func @transform_2(%arg0: i32) -> (i32, i32) {
    %c0_i32 = arith.constant 0 : i32
    %c0_i32_0 = arith.constant 0 : i32
    %c0_i32_1 = arith.constant 0 : i32
    return %c0_i32, %c0_i32_0 : i32, i32
  }
  func.func @transform_3(%arg0: i32) -> (i32, i32) {
    %c0_i32 = arith.constant 0 : i32
    %c0_i32_0 = arith.constant 0 : i32
    return %arg0, %c0_i32 : i32, i32
  }
  func.func @transform_4(%arg0: i32) -> (i32, i32) {
    %c0_i32 = arith.constant 0 : i32
    %c0_i32_0 = arith.constant 0 : i32
    return %arg0, %c0_i32 : i32, i32
  }
}

</mosaic_0001>

<llo_original>
// kernel: tpu_custom_call.1
$region0: #{tpu_custom_call.1}
  #allocation0 [shape = 'u32[]', space=smem, size = 0x4, offset = 0x4, fixed_abs, tag = 'smem constant byte address 0x4 - core index']
  #allocation1 [shape = 'u32[72,128]{1,0:T(1,128)}', space=vmem, size = 0x9000, scoped, tag = 'internal scratch']
  %s0 = inlined_call_operand.hbm [shape: bf16[8,128], index: 0, kind: input, shape index: {}]
  %s1 = inlined_call_operand.hbm [shape: bf16[384,256], index: 1, kind: input, shape index: {}]
  %s2 = inlined_call_operand.hbm [shape: f32[2,256], index: 2, kind: input, shape index: {}]
  %s3 = inlined_call_operand.hbm [shape: bf16[8,128], index: 3, kind: output, shape index: {0}]
  %s4 = inlined_call_operand.hbm [shape: bf16[8,128], index: 4, kind: output, shape index: {1}]
  %5 = xla_tuple %s3, %s4
  %s6 = sld [smem:[#allocation0]]
  $region42: #{tpu_custom_call.1} parent=0
    _
  %s8 = ssub.s32 1, %s6
  %s9 = scalar_select 0, %s8, %s6
  $region1: #{tpu_custom_call.1} parent=0
    #allocation2 [shape = 'u8[2048]{0}', space=vmem, size = 0x800, scoped, tag = 'input window, operand 0, single buffered']
    #allocation3 [shape = 's32[1]{0}', space=sflag, size = 0x4, scoped, tag = 'scoped memory for tpu_custom_call.1']
    #allocation4 [shape = 's32[1]{0}', space=sflag, size = 0x4, scoped, tag = 'scoped memory for tpu_custom_call.1']
    #allocation5 [shape = 'u8[196608]{0}', space=vmem, size = 0x30000, scoped, tag = 'input window, operand 1, single buffered']
    #allocation6 [shape = 's32[1]{0}', space=sflag, size = 0x4, scoped, tag = 'scoped memory for tpu_custom_call.1']
    #allocation7 [shape = 'u8[2048]{0}', space=vmem, size = 0x800, scoped, tag = 'input window, operand 2, single buffered']
    #allocation8 [shape = 'u8[2048]{0}', space=vmem, size = 0x800, scoped, tag = 'output window, operand 0, single buffered']
    #allocation9 [shape = 'u8[2048]{0}', space=vmem, size = 0x800, scoped, tag = 'output window, operand 1, single buffered']
    #allocation10 [shape = 's32[1]{0}', space=sflag, size = 0x4, scoped, tag = 'scoped memory for tpu_custom_call.1']
    %10 = vsyncpa [#allocation3], 0
    %11 = vsyncpa [#allocation6], 0
    %12 = vsyncpa [#allocation4], 0
    %13 = vsyncpa [#allocation10], 0
    // Predicated region
    $region2: #{tpu_custom_call.1} parent=1 // pred_check
      _
    $region3: #{tpu_custom_call.1} parent=1 // pred_check_branch
      %15 = sbr.rel (0) target = $region5
    $region4: #{tpu_custom_call.1} parent=1 // pred_region
      %17 = vsyncadd [#allocation3], 0
      %s19 = sshll.u32 %s0, 4
      %s20 = int_to_ptr.hbm [resolvable:$true] %s19
      %s21 = sshll.u32 [#allocation2], 4
      %s22 = int_to_ptr.vmem [resolvable:$true] %s21
      %24 = dma.hbm_to_vmem [thread:$0]  %s20, 64, %s22, [#allocation3]
    $region5: #{tpu_custom_call.1} parent=1 // pred_fallthru
      _
    // Predicated region
    $region6: #{tpu_custom_call.1} parent=1 // pred_check
      _
    $region7: #{tpu_custom_call.1} parent=1 // pred_check_branch
      %26 = sbr.rel (0) target = $region9
    $region8: #{tpu_custom_call.1} parent=1 // pred_region
      %28 = vsyncadd [#allocation6], 0
      %s29 = sshll.u32 %s1, 4
      %s30 = int_to_ptr.hbm [resolvable:$true] %s29
      %s31 = sshll.u32 [#allocation5], 4
      %s32 = int_to_ptr.vmem [resolvable:$true] %s31
      %37 = dma.hbm_to_vmem [thread:$0]  %s30, 6144, %s32, [#allocation6], 128, 128, 8
    $region9: #{tpu_custom_call.1} parent=1 // pred_fallthru
      _
    // Predicated region
    $region10: #{tpu_custom_call.1} parent=1 // pred_check
      _
    $region11: #{tpu_custom_call.1} parent=1 // pred_check_branch
      %39 = sbr.rel (0) target = $region13
    $region12: #{tpu_custom_call.1} parent=1 // pred_region
      %41 = vsyncadd [#allocation6], 0
      %s43 = sshll.u32 %s2, 4
      %s44 = int_to_ptr.hbm [resolvable:$true] %s43
      %s45 = sshll.u32 [#allocation7], 4
      %s46 = int_to_ptr.vmem [resolvable:$true] %s45
      %48 = dma.hbm_to_vmem [thread:$0]  %s44, 64, %s46, [#allocation6]
    $region13: #{tpu_custom_call.1} parent=1 // pred_fallthru
      _
    // Predicated region
    $region14: #{tpu_custom_call.1} parent=1 // pred_check
      _
    $region15: #{tpu_custom_call.1} parent=1 // pred_check_branch
      %50 = sbr.rel (0) target = $region17
    $region16: #{tpu_custom_call.1} parent=1 // pred_region
      %52 = dma.done [#allocation3], 64
    $region17: #{tpu_custom_call.1} parent=1 // pred_fallthru
      _
    // Predicated region
    $region18: #{tpu_custom_call.1} parent=1 // pred_check
      _
    $region19: #{tpu_custom_call.1} parent=1 // pred_check_branch
      %54 = sbr.rel (0) target = $region21
    $region20: #{tpu_custom_call.1} parent=1 // pred_region
      %56 = dma.done [#allocation6], 6144
    $region21: #{tpu_custom_call.1} parent=1 // pred_fallthru
      _
    // Predicated region
    $region22: #{tpu_custom_call.1} parent=1 // pred_check
      _
    $region23: #{tpu_custom_call.1} parent=1 // pred_check_branch
      %58 = sbr.rel (0) target = $region25
    $region24: #{tpu_custom_call.1} parent=1 // pred_region
      %60 = dma.done [#allocation6], 64
    $region25: #{tpu_custom_call.1} parent=1 // pred_fallthru
      _
    %v61 = vld [vmem:[#allocation2] sm:$0xf]
    %v62 = vld [vmem:[#allocation5] sm:$0xff]
    %v63 = vld [vmem:[#allocation5 + $0x8] sm:$0xff]
    %v64 = vld [vmem:[#allocation5 + $0x10] sm:$0xff]
    %v65 = vld [vmem:[#allocation5 + $0x18] sm:$0xff]
    %v66 = vld [vmem:[#allocation5 + $0x20] sm:$0xff]
    %v67 = vld [vmem:[#allocation5 + $0x28] sm:$0xff]
    %v68 = vld [vmem:[#allocation5 + $0x30] sm:$0xff]
    %v69 = vld [vmem:[#allocation5 + $0x38] sm:$0xff]
    %v70 = vld [vmem:[#allocation5 + $0x40] sm:$0xff]
    %v71 = vld [vmem:[#allocation5 + $0x48] sm:$0xff]
    %v72 = vld [vmem:[#allocation5 + $0x50] sm:$0xff]
    %v73 = vld [vmem:[#allocation5 + $0x58] sm:$0xff]
    %v74 = vld [vmem:[#allocation5 + $0x60] sm:$0xff]
    %v75 = vld [vmem:[#allocation5 + $0x68] sm:$0xff]
    %v76 = vld [vmem:[#allocation5 + $0x70] sm:$0xff]
    %v77 = vld [vmem:[#allocation5 + $0x78] sm:$0xff]
    %v78 = vld [vmem:[#allocation7] ss:$2 sm:$0x3]
    %v80 = vperm.slane %v78, 0
    %v81 = vperm.slane %v78, 1
    %v100 = vunpack.c.l.b16 %v62
    %v101 = vunpack.c.h.b16 %v62
    %v102 = vunpack.c.l.b16 %v63
    %v103 = vunpack.c.h.b16 %v63
    %v104 = vunpack.c.l.b16 %v64
    %v105 = vunpack.c.h.b16 %v64
    %v106 = vunpack.c.l.b16 %v65
    %v107 = vunpack.c.h.b16 %v65
    %v108 = vunpack.c.l.b16 %v66
    %v109 = vunpack.c.h.b16 %v66
    %v110 = vunpack.c.l.b16 %v67
    %v111 = vunpack.c.h.b16 %v67
    %v112 = vunpack.c.l.b16 %v68
    %v113 = vunpack.c.h.b16 %v68
    %v114 = vunpack.c.l.b16 %v69
    %v115 = vunpack.c.h.b16 %v69
    %v116 = vunpack.c.l.b16 %v70
    %v117 = vunpack.c.h.b16 %v70
    %v118 = vunpack.c.l.b16 %v71
    %v119 = vunpack.c.h.b16 %v71
    %v120 = vunpack.c.l.b16 %v72
    %v121 = vunpack.c.h.b16 %v72
    %v122 = vunpack.c.l.b16 %v73
    %v123 = vunpack.c.h.b16 %v73
    %v124 = vunpack.c.l.b16 %v74
    %v125 = vunpack.c.h.b16 %v74
    %v126 = vunpack.c.l.b16 %v75
    %v127 = vunpack.c.h.b16 %v75
    %v128 = vunpack.c.l.b16 %v76
    %v129 = vunpack.c.h.b16 %v76
    %v130 = vunpack.c.l.b16 %v77
    %v131 = vunpack.c.h.b16 %v77
    %v132 = vpack.c.b16 %v102, %v100
    %v133 = vpack.c.b16 %v103, %v101
    %v134 = vpack.c.b16 %v106, %v104
    %v135 = vpack.c.b16 %v107, %v105
    %v136 = vpack.c.b16 %v110, %v108
    %v137 = vpack.c.b16 %v111, %v109
    %v138 = vpack.c.b16 %v114, %v112
    %v139 = vpack.c.b16 %v115, %v113
    %v140 = vpack.c.b16 %v118, %v116
    %v141 = vpack.c.b16 %v119, %v117
    %v142 = vpack.c.b16 %v122, %v120
    %v143 = vpack.c.b16 %v123, %v121
    %v144 = vpack.c.b16 %v126, %v124
    %v145 = vpack.c.b16 %v127, %v125
    %v146 = vpack.c.b16 %v130, %v128
    %v147 = vpack.c.b16 %v131, %v129
    %164 = vmatpush.bf16.msra.mxu0 %v146
    %165 = vmatpush.bf16.msra.mxu0 %v144
    %166 = vmatpush.bf16.msra.mxu0 %v142
    %167 = vmatpush.bf16.msra.mxu0 %v140
    %168 = vmatpush.bf16.msra.mxu0 %v138
    %169 = vmatpush.bf16.msra.mxu0 %v136
    %170 = vmatpush.bf16.msra.mxu0 %v134
    %171 = vmatpush.bf16.msra.mxu0 %v132
    %172 = vmatmul.bf16.gmra.mxu0 %v61
    %v173 = vpop.f32.mrf.mxu0
    %v174 = vadd.f32 %v80, %v173
    %v175 = vpop.f32.mrf.mxu0
    %176 = vdwg.mxu0
    %177 = vmatpush.bf16.msra.mxu0 %v147
    %178 = vmatpush.bf16.msra.mxu0 %v145
    %179 = vmatpush.bf16.msra.mxu0 %v143
    %180 = vmatpush.bf16.msra.mxu0 %v141
    %181 = vmatpush.bf16.msra.mxu0 %v139
    %182 = vmatpush.bf16.msra.mxu0 %v137
    %183 = vmatpush.bf16.msra.mxu0 %v135
    %184 = vmatpush.bf16.msra.mxu0 %v133
    %185 = vmatmul.bf16.gmra.mxu0 %v61
    %v186 = vpop.f32.mrf.mxu0
    %v187 = vadd.f32 %v81, %v186
    %v188 = vpop.f32.mrf.mxu0
    %189 = vdwg.mxu0
    %vm190 = vcmp.gt.f32.partialorder %v174, 0.0
    %vm191 = vcmp.gt.f32.partialorder %v187, 0.0
    %v192 = vmin.f32 %v174, 0.0
    %v193 = vmin.f32 %v187, 0.0
    %v194 = vmul.f32 %v192, 1.442695
    %v195 = vpow.pop %v194
    %v196 = vmul.f32 %v193, 1.442695
    %v197 = vpow.pop %v196
    %v198 = vsub.f32 %v195, 1.0
    %v199 = vsub.f32 %v197, 1.0
    %v200 = vsel %vm190, %v174, %v198
    %v201 = vsel %vm191, %v187, %v199
    %v202 = vpack.c.bf16 %v200, %v200
    %v203 = vpack.c.bf16 %v201, %v201
    %v204 = vld [vmem:[#allocation5 + $0x80] sm:$0xff]
    %v205 = vld [vmem:[#allocation5 + $0x88] sm:$0xff]
    %v206 = vld [vmem:[#allocation5 + $0x90] sm:$0xff]
    %v207 = vld [vmem:[#allocation5 + $0x98] sm:$0xff]
    %v208 = vld [vmem:[#allocation5 + $0xa0] sm:$0xff]
    %v209 = vld [vmem:[#allocation5 + $0xa8] sm:$0xff]
    %v210 = vld [vmem:[#allocation5 + $0xb0] sm:$0xff]
    %v211 = vld [vmem:[#allocation5 + $0xb8] sm:$0xff]
    %v212 = vld [vmem:[#allocation5 + $0xc0] sm:$0xff]
    %v213 = vld [vmem:[#allocation5 + $0xc8] sm:$0xff]
    %v214 = vld [vmem:[#allocation5 + $0xd0] sm:$0xff]
    %v215 = vld [vmem:[#allocation5 + $0xd8] sm:$0xff]
    %v216 = vld [vmem:[#allocation5 + $0xe0] sm:$0xff]
    %v217 = vld [vmem:[#allocation5 + $0xe8] sm:$0xff]
    %v218 = vld [vmem:[#allocation5 + $0xf0] sm:$0xff]
    %v219 = vld [vmem:[#allocation5 + $0xf8] sm:$0xff]
    %v220 = vld [vmem:[#allocation5 + $0x100] sm:$0xff]
    %v221 = vld [vmem:[#allocation5 + $0x108] sm:$0xff]
    %v222 = vld [vmem:[#allocation5 + $0x110] sm:$0xff]
    %v223 = vld [vmem:[#allocation5 + $0x118] sm:$0xff]
    %v224 = vld [vmem:[#allocation5 + $0x120] sm:$0xff]
    %v225 = vld [vmem:[#allocation5 + $0x128] sm:$0xff]
    %v226 = vld [vmem:[#allocation5 + $0x130] sm:$0xff]
    %v227 = vld [vmem:[#allocation5 + $0x138] sm:$0xff]
    %v228 = vld [vmem:[#allocation5 + $0x140] sm:$0xff]
    %v229 = vld [vmem:[#allocation5 + $0x148] sm:$0xff]
    %v230 = vld [vmem:[#allocation5 + $0x150] sm:$0xff]
    %v231 = vld [vmem:[#allocation5 + $0x158] sm:$0xff]
    %v232 = vld [vmem:[#allocation5 + $0x160] sm:$0xff]
    %v233 = vld [vmem:[#allocation5 + $0x168] sm:$0xff]
    %v234 = vld [vmem:[#allocation5 + $0x170] sm:$0xff]
    %v235 = vld [vmem:[#allocation5 + $0x178] sm:$0xff]
    %s236 = scalar_lea.vmem [#allocation7], 1
    %v237 = vld [vmem:[%s236] ss:$2 sm:$0x3]
    %v239 = vperm.slane %v237, 0
    %v240 = vperm.slane %v237, 1
    %v275 = vunpack.c.l.b16 %v204
    %v276 = vunpack.c.h.b16 %v204
    %v277 = vunpack.c.l.b16 %v205
    %v278 = vunpack.c.h.b16 %v205
    %v279 = vunpack.c.l.b16 %v206
    %v280 = vunpack.c.h.b16 %v206
    %v281 = vunpack.c.l.b16 %v207
    %v282 = vunpack.c.h.b16 %v207
    %v283 = vunpack.c.l.b16 %v208
    %v284 = vunpack.c.h.b16 %v208
    %v285 = vunpack.c.l.b16 %v209
    %v286 = vunpack.c.h.b16 %v209
    %v287 = vunpack.c.l.b16 %v210
    %v288 = vunpack.c.h.b16 %v210
    %v289 = vunpack.c.l.b16 %v211
    %v290 = vunpack.c.h.b16 %v211
    %v291 = vunpack.c.l.b16 %v212
    %v292 = vunpack.c.h.b16 %v212
    %v293 = vunpack.c.l.b16 %v213
    %v294 = vunpack.c.h.b16 %v213
    %v295 = vunpack.c.l.b16 %v214
    %v296 = vunpack.c.h.b16 %v214
    %v297 = vunpack.c.l.b16 %v215
    %v298 = vunpack.c.h.b16 %v215
    %v299 = vunpack.c.l.b16 %v216
    %v300 = vunpack.c.h.b16 %v216
    %v301 = vunpack.c.l.b16 %v217
    %v302 = vunpack.c.h.b16 %v217
    %v303 = vunpack.c.l.b16 %v218
    %v304 = vunpack.c.h.b16 %v218
    %v305 = vunpack.c.l.b16 %v219
    %v306 = vunpack.c.h.b16 %v219
    %v307 = vunpack.c.l.b16 %v220
    %v308 = vunpack.c.h.b16 %v220
    %v309 = vunpack.c.l.b16 %v221
    %v310 = vunpack.c.h.b16 %v221
    %v311 = vunpack.c.l.b16 %v222
    %v312 = vunpack.c.h.b16 %v222
    %v313 = vunpack.c.l.b16 %v223
    %v314 = vunpack.c.h.b16 %v223
    %v315 = vunpack.c.l.b16 %v224
    %v316 = vunpack.c.h.b16 %v224
    %v317 = vunpack.c.l.b16 %v225
    %v318 = vunpack.c.h.b16 %v225
    %v319 = vunpack.c.l.b16 %v226
    %v320 = vunpack.c.h.b16 %v226
    %v321 = vunpack.c.l.b16 %v227
    %v322 = vunpack.c.h.b16 %v227
    %v323 = vunpack.c.l.b16 %v228
    %v324 = vunpack.c.h.b16 %v228
    %v325 = vunpack.c.l.b16 %v229
    %v326 = vunpack.c.h.b16 %v229
    %v327 = vunpack.c.l.b16 %v230
    %v328 = vunpack.c.h.b16 %v230
    %v329 = vunpack.c.l.b16 %v231
    %v330 = vunpack.c.h.b16 %v231
    %v331 = vunpack.c.l.b16 %v232
    %v332 = vunpack.c.h.b16 %v232
    %v333 = vunpack.c.l.b16 %v233
    %v334 = vunpack.c.h.b16 %v233
    %v335 = vunpack.c.l.b16 %v234
    %v336 = vunpack.c.h.b16 %v234
    %v337 = vunpack.c.l.b16 %v235
    %v338 = vunpack.c.h.b16 %v235
    %v339 = vpack.c.b16 %v277, %v275
    %v340 = vpack.c.b16 %v278, %v276
    %v341 = vpack.c.b16 %v281, %v279
    %v342 = vpack.c.b16 %v282, %v280
    %v343 = vpack.c.b16 %v285, %v283
    %v344 = vpack.c.b16 %v286, %v284
    %v345 = vpack.c.b16 %v289, %v287
    %v346 = vpack.c.b16 %v290, %v288
    %v347 = vpack.c.b16 %v293, %v291
    %v348 = vpack.c.b16 %v294, %v292
    %v349 = vpack.c.b16 %v297, %v295
    %v350 = vpack.c.b16 %v298, %v296
    %v351 = vpack.c.b16 %v301, %v299
    %v352 = vpack.c.b16 %v302, %v300
    %v353 = vpack.c.b16 %v305, %v303
    %v354 = vpack.c.b16 %v306, %v304
    %v355 = vpack.c.b16 %v309, %v307
    %v356 = vpack.c.b16 %v310, %v308
    %v357 = vpack.c.b16 %v313, %v311
    %v358 = vpack.c.b16 %v314, %v312
    %v359 = vpack.c.b16 %v317, %v315
    %v360 = vpack.c.b16 %v318, %v316
    %v361 = vpack.c.b16 %v321, %v319
    %v362 = vpack.c.b16 %v322, %v320
    %v363 = vpack.c.b16 %v325, %v323
    %v364 = vpack.c.b16 %v326, %v324
    %v365 = vpack.c.b16 %v329, %v327
    %v366 = vpack.c.b16 %v330, %v328
    %v367 = vpack.c.b16 %v333, %v331
    %v368 = vpack.c.b16 %v334, %v332
    %v369 = vpack.c.b16 %v337, %v335
    %v370 = vpack.c.b16 %v338, %v336
    %403 = vmatpush.bf16.msra.mxu0 %v353
    %404 = vmatpush.bf16.msra.mxu0 %v351
    %405 = vmatpush.bf16.msra.mxu0 %v349
    %406 = vmatpush.bf16.msra.mxu0 %v347
    %407 = vmatpush.bf16.msra.mxu0 %v345
    %408 = vmatpush.bf16.msra.mxu0 %v343
    %409 = vmatpush.bf16.msra.mxu0 %v341
    %410 = vmatpush.bf16.msra.mxu0 %v339
    %411 = vmatmul.bf16.gmra.mxu0 %v202
    %v412 = vpop.f32.mrf.mxu0
    %v413 = vadd.f32 %v239, %v412
    %v414 = vpop.f32.mrf.mxu0
    %415 = vdwg.mxu0
    %416 = vmatpush.bf16.msra.mxu0 %v369
    %417 = vmatpush.bf16.msra.mxu0 %v367
    %418 = vmatpush.bf16.msra.mxu0 %v365
    %419 = vmatpush.bf16.msra.mxu0 %v363
    %420 = vmatpush.bf16.msra.mxu0 %v361
    %421 = vmatpush.bf16.msra.mxu0 %v359
    %422 = vmatpush.bf16.msra.mxu0 %v357
    %423 = vmatpush.bf16.msra.mxu0 %v355
    %424 = vmatmul.bf16.gmra.mxu0 %v203
    %v425 = vpop.f32.mrf.mxu0
    %v426 = vadd.f32 %v413, %v425
    %v427 = vpop.f32.mrf.mxu0
    %428 = vdwg.mxu0
    %429 = vmatpush.bf16.msra.mxu0 %v354
    %430 = vmatpush.bf16.msra.mxu0 %v352
    %431 = vmatpush.bf16.msra.mxu0 %v350
    %432 = vmatpush.bf16.msra.mxu0 %v348
    %433 = vmatpush.bf16.msra.mxu0 %v346
    %434 = vmatpush.bf16.msra.mxu0 %v344
    %435 = vmatpush.bf16.msra.mxu0 %v342
    %436 = vmatpush.bf16.msra.mxu0 %v340
    %437 = vmatmul.bf16.gmra.mxu0 %v202
    %v438 = vpop.f32.mrf.mxu0
    %v439 = vadd.f32 %v240, %v438
    %v440 = vpop.f32.mrf.mxu0
    %441 = vdwg.mxu0
    %442 = vmatpush.bf16.msra.mxu0 %v370
    %443 = vmatpush.bf16.msra.mxu0 %v368
    %444 = vmatpush.bf16.msra.mxu0 %v366
    %445 = vmatpush.bf16.msra.mxu0 %v364
    %446 = vmatpush.bf16.msra.mxu0 %v362
    %447 = vmatpush.bf16.msra.mxu0 %v360
    %448 = vmatpush.bf16.msra.mxu0 %v358
    %449 = vmatpush.bf16.msra.mxu0 %v356
    %450 = vmatmul.bf16.gmra.mxu0 %v203
    %v451 = vpop.f32.mrf.mxu0
    %v452 = vadd.f32 %v439, %v451
    %v453 = vpop.f32.mrf.mxu0
    %454 = vdwg.mxu0
    %v455 = vmul.f32 %v426, %v426
    %456 = vadd.xlane.f32.xlu0 %v455
    %v457 = vpop.xlane.xlu0 %456
    %v458 = vrsqrt.pop %v457
    %v459 = vmul.f32 %v458, %v457
    %v460 = vmul.f32 %v459, %v458
    %v461 = vmul.f32 0.5, %v460
    %v462 = vsub.f32 1.5, %v461
    %v463 = vmul.f32 %v458, %v462
    %vm464 = vweird.f32 %v457
    %vm465 = vweird.f32 %v458
    %vm466 = vmor %vm464, %vm465
    %v467 = vsel %vm466, %v458, %v463
    %v468 = vmul.f32 %v467, 2.0
    %v469 = vmul.f32 %v452, %v452
    %470 = vadd.xlane.f32.xlu0 %v469
    %v471 = vpop.xlane.xlu0 %470
    %v472 = vrsqrt.pop %v471
    %v473 = vmul.f32 %v472, %v471
    %v474 = vmul.f32 %v473, %v472
    %v475 = vmul.f32 0.5, %v474
    %v476 = vsub.f32 1.5, %v475
    %v477 = vmul.f32 %v472, %v476
    %vm478 = vweird.f32 %v471
    %vm479 = vweird.f32 %v472
    %vm480 = vmor %vm478, %vm479
    %v481 = vsel %vm480, %v472, %v477
    %v482 = vmul.f32 %v426, %v468
    %v483 = vpack.c.bf16 %v482, %v482
    %484 = vst [vmem:[#allocation8] sm:$0xf] %v483
    %v485 = vmul.f32 %v452, %v481
    %v486 = vpack.c.bf16 %v485, %v485
    %487 = vst [vmem:[#allocation9] sm:$0xf] %v486
    // Predicated region
    $region26: #{tpu_custom_call.1} parent=1 // pred_check
      _
    $region27: #{tpu_custom_call.1} parent=1 // pred_check_branch
      %489 = sbr.rel (0) target = $region29
    $region28: #{tpu_custom_call.1} parent=1 // pred_region
      %491 = vsyncadd [#allocation4], 0
      %s493 = sshll.u32 [#allocation8], 4
      %s494 = int_to_ptr.vmem [resolvable:$true] %s493
      %s495 = sshll.u32 %s3, 4
      %s496 = int_to_ptr.hbm [resolvable:$true] %s495
      %498 = dma.vmem_to_hbm [thread:$0]  %s494, 64, %s496, [#allocation4]
    $region29: #{tpu_custom_call.1} parent=1 // pred_fallthru
      _
    // Predicated region
    $region30: #{tpu_custom_call.1} parent=1 // pred_check
      _
    $region31: #{tpu_custom_call.1} parent=1 // pred_check_branch
      %500 = sbr.rel (0) target = $region33
    $region32: #{tpu_custom_call.1} parent=1 // pred_region
      %502 = vsyncadd [#allocation10], 0
      %s504 = sshll.u32 [#allocation9], 4
      %s505 = int_to_ptr.vmem [resolvable:$true] %s504
      %s506 = sshll.u32 %s4, 4
      %s507 = int_to_ptr.hbm [resolvable:$true] %s506
      %509 = dma.vmem_to_hbm [thread:$0]  %s505, 64, %s507, [#allocation10]
    $region33: #{tpu_custom_call.1} parent=1 // pred_fallthru
      _
    // Predicated region
    $region34: #{tpu_custom_call.1} parent=1 // pred_check
      _
    $region35: #{tpu_custom_call.1} parent=1 // pred_check_branch
      %511 = sbr.rel (0) target = $region37
    $region36: #{tpu_custom_call.1} parent=1 // pred_region
      %513 = dma.done [#allocation4], 64
    $region37: #{tpu_custom_call.1} parent=1 // pred_fallthru
      _
    // Predicated region
    $region38: #{tpu_custom_call.1} parent=1 // pred_check
      _
    $region39: #{tpu_custom_call.1} parent=1 // pred_check_branch
      %515 = sbr.rel (0) target = $region41
    $region40: #{tpu_custom_call.1} parent=1 // pred_region
      %517 = dma.done [#allocation10], 64
    $region41: #{tpu_custom_call.1} parent=1 // pred_fallthru
      _
    %518 = vsyncpa [#allocation3], 1
    %519 = vsyncpa [#allocation6], 1
    %520 = vsyncpa [#allocation4], 1
    %521 = vsyncpa [#allocation10], 1

</llo_original>
